<compile_context>
chip_gen: v7x
topology: tpu7x:2x2x1
jax: 0.10.0
libtpu: 0.0.40
codegen_flags: <defaults>
</compile_context>

<pallas_src>
import jax
import jax.numpy as jnp
import numpy as np
from jax.experimental import pallas as pl
from jax.experimental.pallas import tpu as pltpu

H = W = 5            # spatial size implied by 8 * H * W == 200
CIN = 8
COUT = 8
K = 3
FEAT = H * W * CIN   # 200 input features (NHWC flatten) == 200 conv-out features
NOUT = 4
TB_MAX = 1024        # batch tile: >=512 rows amortizes per-step overhead,
                     # 2 bufs x 1024 x 400 B (bf16) ~ 0.8 MiB << any VMEM budget

# ----------------------------------------------------------------------------
# Static im2col selection matrix (built once with numpy):
#   _IM2COL[x_flat, p, k] = 1  iff  NHWC-flat input element x_flat lands in
#   patch position p = h*5+w at patch column k = ic*9 + kh*3 + kw (pad=1).
_IM2COL = np.zeros((FEAT, H * W, CIN * K * K), np.float32)
for _h in range(H):
    for _w in range(W):
        _p = _h * W + _w
        for _kh in range(K):
            for _kw in range(K):
                _hh, _ww = _h + _kh - 1, _w + _kw - 1
                if 0 <= _hh < H and 0 <= _ww < W:
                    for _ic in range(CIN):
                        _IM2COL[(_hh * W + _ww) * CIN + _ic,
                                _p, _ic * K * K + _kh * K + _kw] = 1.0


def dqn_kernel(x_ref, w_ref, b_ref, o_ref):
    # x: (TB, 200) bf16   w: (200, 4) bf16   b: (1, 4) f32   o: (TB, 4) f32
    acc = jnp.dot(x_ref[...], w_ref[...], preferred_element_type=jnp.float32)
    o_ref[...] = acc + b_ref[...]


def _fold_params(conv_w, conv_b, lin_w, lin_b):
    """Fold im2col + conv1 + lin into (W_total (200,4), b_total (4,)), in f32."""
    wc = conv_w.reshape(COUT, CIN * K * K).astype(jnp.float32)      # (8, 72)
    wl = lin_w.reshape(NOUT, COUT, H * W).astype(jnp.float32)       # (4, 8, 25)
    sel = jnp.asarray(_IM2COL)                                      # (200, 25, 72)
    # W_total[x, n] = sum_{p,k,oc} sel[x,p,k] * conv_w[oc,k] * lin_w[n,oc,p]
    w_total = jnp.einsum('xpk,ok,nop->xn', sel, wc, wl)             # (200, 4) f32
    b_total = (jnp.einsum('o,nop->n', conv_b.astype(jnp.float32), wl)
               + lin_b.astype(jnp.float32))                         # (4,) f32
    return w_total, b_total


def dqn_forward(x_nhwc, conv_w, conv_b, lin_w, lin_b):
    """x_nhwc: (B, 5, 5, 8). Returns (B, 4) float32 — same as DQN.forward."""
    B = x_nhwc.shape[0]

    # --- wrapper glue (plain JAX, f32 folding before any bf16 cast) ---------
    w_total, b_total = _fold_params(conv_w, conv_b, lin_w, lin_b)
    w_bf = w_total.astype(jnp.bfloat16)                 # (200, 4)
    b_f32 = b_total.reshape(1, NOUT)                    # (1, 4), added post-acc

    x_flat = x_nhwc.reshape(B, FEAT).astype(jnp.bfloat16)   # NHWC flatten (B, 200)

    # --- batch tiling --------------------------------------------------------
    if B <= TB_MAX:
        TB, Bp = B, B                      # one block == full dims (always legal)
    else:
        TB = TB_MAX
        Bp = pl.cdiv(B, TB) * TB
    if Bp != B:
        x_flat = jnp.pad(x_flat, ((0, Bp - B), (0, 0)))
    grid = (Bp // TB,)

    cost = pl.CostEstimate(
        flops=2 * Bp * FEAT * NOUT,
        transcendentals=0,
        bytes_accessed=Bp * FEAT * 2 + FEAT * NOUT * 2 + NOUT * 4
                       + Bp * NOUT * 4)

    out = pl.pallas_call(
        dqn_kernel,
        out_shape=jax.ShapeDtypeStruct((Bp, NOUT), jnp.float32),
        grid=grid,
        in_specs=[
            pl.BlockSpec((TB, FEAT), lambda i: (i, 0)),      # activation stream
            pl.BlockSpec((FEAT, NOUT), lambda i: (0, 0)),    # fused weight (resident)
            pl.BlockSpec((1, NOUT), lambda i: (0, 0)),       # fused bias (resident)
        ],
        out_specs=pl.BlockSpec((TB, NOUT), lambda i: (i, 0)),
        compiler_params=pltpu.CompilerParams(
            dimension_semantics=("parallel",),               # v7x: shard batch on 2 TCs
            vmem_limit_bytes=32 * 1024 * 1024),              # explicit, safe on v5e/v6e/v7x
        cost_estimate=cost,
    )(x_flat, w_bf, b_f32)

    return out[:B]


if __name__ == "__main__":
    key = jax.random.PRNGKey(0)
    k1, k2, k3, k4, k5 = jax.random.split(key, 5)
    B = 2

    # Input implied by the module: 8*H*W == 200  =>  (B, 5, 5, 8) NHWC
    x = jax.random.normal(k1, (B, H, W, CIN), dtype=jnp.float32)

    # Deterministic parameter init (PyTorch-default-style uniform bounds)
    fan_conv = CIN * K * K
    bconv = 1.0 / np.sqrt(fan_conv)
    blin = 1.0 / np.sqrt(FEAT)
    conv_w = jax.random.uniform(k2, (COUT, CIN, K, K), jnp.float32, -bconv, bconv)
    conv_b = jax.random.uniform(k3, (COUT,), jnp.float32, -bconv, bconv)
    lin_w = jax.random.uniform(k4, (NOUT, FEAT), jnp.float32, -blin, blin)
    lin_b = jax.random.uniform(k5, (NOUT,), jnp.float32, -blin, blin)

    out = jax.block_until_ready(dqn_forward(x, conv_w, conv_b, lin_w, lin_b))

    # Pure-JAX f32 reference (mirrors the PyTorch forward exactly)
    y = jax.lax.conv_general_dilated(
        jnp.transpose(x, (0, 3, 1, 2)), conv_w, (1, 1), ((1, 1), (1, 1)),
        dimension_numbers=('NCHW', 'OIHW', 'NCHW'))
    y = y + conv_b[None, :, None, None]
    ref = y.reshape(B, COUT * H * W) @ lin_w.T + lin_b

    assert out.shape == (B, NOUT)
    # bf16 activations/weights with f32 accumulation => loose tolerance.
    np.testing.assert_allclose(np.asarray(out), np.asarray(ref),
                               atol=2e-2, rtol=2e-2)
    print("KERNEL_OK")
</pallas_src>

<mosaic_0001>
module attributes {stable_mosaic.version = 11 : i64} {
  func.func @dqn_kernel(%arg0: i32, %arg1: memref<2x200xbf16, #tpu.memory_space<vmem>>, %arg2: memref<200x4xbf16, #tpu.memory_space<vmem>>, %arg3: memref<1x4xf32, #tpu.memory_space<vmem>>, %arg4: memref<2x4xf32, #tpu.memory_space<vmem>>) attributes {dimension_semantics = [#tpu.dimension_semantics<parallel>], iteration_bounds = array<i64: 1>, scalar_prefetch = 0 : i64, scratch_operands = 0 : i64, tpu.core_type = #tpu.core_type<tc>, window_params = [{transform_indices = @transform_0, window_bounds = array<i64: 2, 200>}, {pipeline_mode = #tpu.pipeline_mode<synchronous>, transform_indices = @transform_1, window_bounds = array<i64: 200, 4>}, {pipeline_mode = #tpu.pipeline_mode<synchronous>, transform_indices = @transform_2, window_bounds = array<i64: 1, 4>}, {transform_indices = @transform_3, window_bounds = array<i64: 2, 4>}]} {
    %c0 = arith.constant 0 : index
    %c0_0 = arith.constant 0 : index
    %0 = vector.load %arg1[%c0, %c0_0] : memref<2x200xbf16, #tpu.memory_space<vmem>>, vector<2x200xbf16>
    %c0_1 = arith.constant 0 : index
    %c0_2 = arith.constant 0 : index
    %1 = vector.load %arg2[%c0_1, %c0_2] : memref<200x4xbf16, #tpu.memory_space<vmem>>, vector<200x4xbf16>
    %cst = arith.constant dense<0.000000e+00> : vector<2x4xf32>
    %2 = tpu.matmul %0, %1, %cst {dimension_numbers = #tpu.dot_dimension_numbers<[1], [0], [0], [1], [0, 0, 1, 1], [], []>} : vector<2x200xbf16>, vector<200x4xbf16>, vector<2x4xf32> -> vector<2x4xf32>
    %c0_3 = arith.constant 0 : index
    %c0_4 = arith.constant 0 : index
    %3 = vector.load %arg3[%c0_3, %c0_4] : memref<1x4xf32, #tpu.memory_space<vmem>>, vector<1x4xf32>
    %4 = vector.broadcast %3 : vector<1x4xf32> to vector<2x4xf32>
    %5 = arith.addf %2, %4 : vector<2x4xf32>
    %c0_5 = arith.constant 0 : index
    %c0_6 = arith.constant 0 : index
    %6 = vector.load %arg4[%c0_5, %c0_6] : memref<2x4xf32, #tpu.memory_space<vmem>>, vector<2x4xf32>
    tpu.vector_store %arg4[%c0_5, %c0_6], %5 {strides = array<i32>} : memref<2x4xf32, #tpu.memory_space<vmem>>, vector<2x4xf32>,
    return
  }
  func.func @transform_0(%arg0: i32) -> (i32, i32) {
    %c0_i32 = arith.constant 0 : i32
    %c0_i32_0 = arith.constant 0 : i32
    return %arg0, %c0_i32 : i32, i32
  }
  func.func @transform_1(%arg0: i32) -> (i32, i32) {
    %c0_i32 = arith.constant 0 : i32
    %c0_i32_0 = arith.constant 0 : i32
    %c0_i32_1 = arith.constant 0 : i32
    return %c0_i32, %c0_i32_0 : i32, i32
  }
  func.func @transform_2(%arg0: i32) -> (i32, i32) {
    %c0_i32 = arith.constant 0 : i32
    %c0_i32_0 = arith.constant 0 : i32
    %c0_i32_1 = arith.constant 0 : i32
    return %c0_i32, %c0_i32_0 : i32, i32
  }
  func.func @transform_3(%arg0: i32) -> (i32, i32) {
    %c0_i32 = arith.constant 0 : i32
    %c0_i32_0 = arith.constant 0 : i32
    return %arg0, %c0_i32 : i32, i32
  }
}

</mosaic_0001>

<llo_original>
// kernel: tpu_custom_call.1
$region0: #{tpu_custom_call.1}
  #allocation0 [shape = 'u32[]', space=smem, size = 0x4, offset = 0x4, fixed_abs, tag = 'smem constant byte address 0x4 - core index']
  #allocation1 [shape = 'u32[144,128]{1,0:T(1,128)}', space=vmem, size = 0x12000, scoped, tag = 'internal scratch']
  %s0 = inlined_call_operand.vmem [shape: bf16[2,200], index: 0, kind: input, shape index: {}]
  %s1 = inlined_call_operand.vmem [shape: bf16[200,4], index: 1, kind: input, shape index: {}]
  %s2 = inlined_call_operand.vmem [shape: f32[1,4], index: 2, kind: input, shape index: {}]
  %s3 = inlined_call_operand.hbm [shape: f32[2,4], index: 3, kind: output, shape index: {}]
  %s4 = sld [smem:[#allocation0]]
  $region22: #{tpu_custom_call.1} parent=0
    _
  %s6 = ssub.s32 1, %s4
  %s7 = scalar_select 0, %s6, %s4
  $region1: #{tpu_custom_call.1} parent=0
    #allocation2 [shape = 'u8[1024]{0}', space=vmem, size = 0x400, scoped, tag = 'output window, operand 0, single buffered']
    #allocation3 [shape = 's32[1]{0}', space=sflag, size = 0x4, scoped, tag = 'scoped memory for tpu_custom_call.1']
    %8 = vsyncpa [#allocation3], 0
    // Predicated region
    $region2: #{tpu_custom_call.1} parent=1 // pred_check
      _
    $region3: #{tpu_custom_call.1} parent=1 // pred_check_branch
      %10 = sbr.rel (0) target = $region5
    $region4: #{tpu_custom_call.1} parent=1 // pred_region
      _
    $region5: #{tpu_custom_call.1} parent=1 // pred_fallthru
      _
    // Predicated region
    $region6: #{tpu_custom_call.1} parent=1 // pred_check
      _
    $region7: #{tpu_custom_call.1} parent=1 // pred_check_branch
      %12 = sbr.rel (0) target = $region9
    $region8: #{tpu_custom_call.1} parent=1 // pred_region
      _
    $region9: #{tpu_custom_call.1} parent=1 // pred_fallthru
      _
    // Predicated region
    $region10: #{tpu_custom_call.1} parent=1 // pred_check
      _
    $region11: #{tpu_custom_call.1} parent=1 // pred_check_branch
      %14 = sbr.rel (0) target = $region13
    $region12: #{tpu_custom_call.1} parent=1 // pred_region
      _
    $region13: #{tpu_custom_call.1} parent=1 // pred_fallthru
      _
    %v16 = vld [vmem:[%s0] sm:$0x3]
    %v17 = vld [vmem:[%s1] sm:$0xf]
    %v18 = vld [vmem:[%s1 + $0x4] sm:$0xf]
    %v19 = vld [vmem:[%s1 + $0x8] sm:$0xf]
    %v20 = vld [vmem:[%s1 + $0xc] sm:$0xf]
    %v21 = vld [vmem:[%s1 + $0x10] sm:$0xf]
    %v22 = vld [vmem:[%s1 + $0x14] sm:$0xf]
    %v23 = vld [vmem:[%s1 + $0x18] sm:$0xf]
    %v24 = vld [vmem:[%s1 + $0x1c] sm:$0xf]
    %v25 = vld [vmem:[%s1 + $0x20] sm:$0xf]
    %v26 = vld [vmem:[%s1 + $0x24] sm:$0xf]
    %v27 = vld [vmem:[%s1 + $0x28] sm:$0xf]
    %v28 = vld [vmem:[%s1 + $0x2c] sm:$0xf]
    %v29 = vld [vmem:[%s1 + $0x30] sm:$0xf]
    %v30 = vld [vmem:[%s1 + $0x34] sm:$0xf]
    %v31 = vld [vmem:[%s1 + $0x38] sm:$0xf]
    %v32 = vld [vmem:[%s1 + $0x3c] sm:$0xf]
    %v33 = vld [vmem:[%s1 + $0x40] sm:$0xf]
    %v34 = vld [vmem:[%s1 + $0x44] sm:$0xf]
    %v35 = vld [vmem:[%s1 + $0x48] sm:$0xf]
    %v36 = vld [vmem:[%s1 + $0x4c] sm:$0xf]
    %v37 = vld [vmem:[%s1 + $0x50] sm:$0xf]
    %v38 = vld [vmem:[%s1 + $0x54] sm:$0xf]
    %v39 = vld [vmem:[%s1 + $0x58] sm:$0xf]
    %v40 = vld [vmem:[%s1 + $0x5c] sm:$0xf]
    %v41 = vld [vmem:[%s1 + $0x60] sm:$0xf]
    %v42 = vld [vmem:[%s2] sm:$0x1]
    %v44 = vlaneseq
    %v45 = vshrl.u32 %v44, 7
    %v46 = vsub.s32 0, %v45
    %v47 = vrot.slane %v42, %v46
    %v51 = vunpack.c.l.s4 1966171168
    %v52 = vunpack.c.0.s8 %v51
    %v53 = vlaneseq
    %v54 = vshrl.u32 %v53, 7
    %v55 = vsub.s32 %v52, %v54
    %v56 = vrot.slane %v16, %v55
    %v57 = vcombine.high %v56, %v56
    %v59 = vunpack.c.l.s4 1966171168
    %v60 = vunpack.c.0.s8 %v59
    %v61 = vlaneseq
    %v62 = vshrl.u32 %v61, 7
    %v63 = vsub.s32 %v60, %v62
    %v64 = vrot.slane %v56, %v63
    %v66 = vunpack.c.l.s4 1966171168
    %v67 = vunpack.c.0.s8 %v66
    %v68 = vlaneseq
    %v69 = vshrl.u32 %v68, 7
    %v70 = vsub.s32 %v67, %v69
    %v71 = vrot.slane %v57, %v70
    %v98 = vunpack.c.l.b16 %v17
    %v99 = vunpack.c.l.b16 %v18
    %v100 = vunpack.c.l.b16 %v19
    %v101 = vunpack.c.l.b16 %v20
    %v102 = vunpack.c.l.b16 %v21
    %v103 = vunpack.c.l.b16 %v22
    %v104 = vunpack.c.l.b16 %v23
    %v105 = vunpack.c.l.b16 %v24
    %v106 = vunpack.c.l.b16 %v25
    %v107 = vunpack.c.l.b16 %v26
    %v108 = vunpack.c.l.b16 %v27
    %v109 = vunpack.c.l.b16 %v28
    %v110 = vunpack.c.l.b16 %v29
    %v111 = vunpack.c.l.b16 %v30
    %v112 = vunpack.c.l.b16 %v31
    %v113 = vunpack.c.l.b16 %v32
    %v114 = vunpack.c.l.b16 %v33
    %v115 = vunpack.c.l.b16 %v34
    %v116 = vunpack.c.l.b16 %v35
    %v117 = vunpack.c.l.b16 %v36
    %v118 = vunpack.c.l.b16 %v37
    %v119 = vunpack.c.l.b16 %v38
    %v120 = vunpack.c.l.b16 %v39
    %v121 = vunpack.c.l.b16 %v40
    %v122 = vunpack.c.l.b16 %v41
    %v123 = vpack.c.b16 %v99, %v98
    %v124 = vpack.c.b16 %v101, %v100
    %v125 = vpack.c.b16 %v103, %v102
    %v126 = vpack.c.b16 %v105, %v104
    %v127 = vpack.c.b16 %v107, %v106
    %v128 = vpack.c.b16 %v109, %v108
    %v129 = vpack.c.b16 %v111, %v110
    %v130 = vpack.c.b16 %v113, %v112
    %v131 = vpack.c.b16 %v115, %v114
    %v132 = vpack.c.b16 %v117, %v116
    %v133 = vpack.c.b16 %v119, %v118
    %v134 = vpack.c.b16 %v121, %v120
    %v135 = vpack.c.b16 %v122, %v122
    %vm148 = vcmask 588800
    %v150 = vsel %vm148, %v71, 0
    %vm152 = vcmask 1043456
    %v154 = vsel %vm152, %v135, 0
    %156 = vmatprep.subr.bf16.mxu0 0
    %157 = vmatpush1.bf16.msra.mxu0 %v123
    %158 = vmatprep.subr.bf16.mxu0 0
    %159 = vmatpush1.bf16.msra.mxu0 %v124
    %160 = vmatprep.subr.bf16.mxu0 0
    %161 = vmatpush1.bf16.msra.mxu0 %v125
    %162 = vmatprep.subr.bf16.mxu0 0
    %163 = vmatpush1.bf16.msra.mxu0 %v126
    %164 = vmatprep.subr.bf16.mxu0 0
    %165 = vmatpush1.bf16.msra.mxu0 %v127
    %166 = vmatprep.subr.bf16.mxu0 0
    %167 = vmatpush1.bf16.msra.mxu0 %v128
    %168 = vmatprep.subr.bf16.mxu0 0
    %169 = vmatpush1.bf16.msra.mxu0 %v129
    %170 = vmatprep.subr.bf16.mxu0 0
    %171 = vmatpush1.bf16.msra.mxu0 %v130
    %172 = vmatprep.subr.bf16.mxu0 0
    %173 = vmatpush1.bf16.msra.mxu0 %v131
    %174 = vmatprep.subr.bf16.mxu0 0
    %175 = vmatpush1.bf16.msra.mxu0 %v132
    %176 = vmatprep.subr.bf16.mxu0 0
    %177 = vmatpush1.bf16.msra.mxu0 %v133
    %178 = vmatprep.subr.bf16.mxu0 0
    %179 = vmatpush1.bf16.msra.mxu0 %v134
    %180 = vmatprep.subr.bf16.mxu0 0
    %181 = vmatpush1.bf16.msra.mxu0 %v154
    %182 = vmatprep.subr.bf16.mxu0 0
    %183 = vmatpush1.bf16.msra.mxu0 0
    %184 = vmatprep.subr.bf16.mxu0 0
    %185 = vmatpush1.bf16.msra.mxu0 0
    %186 = vmatprep.subr.bf16.mxu0 0
    %187 = vmatpush1.bf16.msra.mxu0 0
    %188 = vmatprep.mubr.bf16.mxu0 %v150
    %189 = vmatmul.mubr.bf16.gmra.mrb[0].mxu0 %v64
    %v190 = vpop.f32.mrb[0].mxu0
    %v191 = vadd.f32 %v47, %v190
    %v192 = vpop.f32.mrb[0].mxu0
    %v193 = vpop.f32.mrb[0].mxu0
    %v194 = vpop.f32.mrb[0].mxu0
    %195 = vdwg.mxu0
    %vm196 = vcmask 25600
    %197 = vst.msk [vmem:[#allocation2] sm:$0x3] %vm196, %v191
    // Predicated region
    $region14: #{tpu_custom_call.1} parent=1 // pred_check
      _
    $region15: #{tpu_custom_call.1} parent=1 // pred_check_branch
      %199 = sbr.rel (0) target = $region17
    $region16: #{tpu_custom_call.1} parent=1 // pred_region
      %s201 = ssub.s32 32, 32
      %202 = vsyncadd [#allocation3], %s201
      %s204 = sshll.u32 [#allocation2], 4
      %s205 = int_to_ptr.vmem [resolvable:$true] %s204
      %207 = dma.vmem_to_hbm [thread:$0]  %s205, 32, %s3, [#allocation3]
    $region17: #{tpu_custom_call.1} parent=1 // pred_fallthru
      _
    // Predicated region
    $region18: #{tpu_custom_call.1} parent=1 // pred_check
      _
    $region19: #{tpu_custom_call.1} parent=1 // pred_check_branch
      %209 = sbr.rel (0) target = $region21
    $region20: #{tpu_custom_call.1} parent=1 // pred_region
      %210 = dma.done [#allocation3], 32
    $region21: #{tpu_custom_call.1} parent=1 // pred_fallthru
      _
    %211 = vsyncpa [#allocation3], 1

</llo_original>
